<compile_context>
chip_gen: v7x
topology: tpu7x:2x2x1
jax: 0.10.0
libtpu: 0.0.40
codegen_flags: <defaults>
</compile_context>

<pallas_src>
import jax
import jax.numpy as jnp
import numpy as np
from jax.experimental import pallas as pl
from jax.experimental.pallas import tpu as pltpu


def _fuzzy_neuron_kernel(x_ref, rho_w_ref, rho_b_ref, a_ref, inv_ba_ref,
                         d_ref, inv_dc_ref, out_ref):
    """One batch tile.

    x_ref:      (A, TB)   f32   batch tile, transposed (antecedents on sublanes)
    rho_w_ref:  (R, A)    f32   rho[:, :A]
    rho_b_ref:  (R, 1)    f32   rho[:, A]
    a_ref:      (R, A)    f32   sorted abcd[..., 0]
    inv_ba_ref: (R, A)    f32   1 / (b - a)
    d_ref:      (R, A)    f32   sorted abcd[..., 3]
    inv_dc_ref: (R, A)    f32   1 / (d - c)
    out_ref:    (1, TB)   f32   lane-dense output tile
    """
    x = x_ref[...]                      # (A, TB)
    rho_w = rho_w_ref[...]              # (R, A)
    rho_b = rho_b_ref[...]              # (R, 1)
    a = a_ref[...]                      # (R, A)
    inv_ba = inv_ba_ref[...]            # (R, A)
    d = d_ref[...]                      # (R, A)
    inv_dc = inv_dc_ref[...]            # (R, A)

    A = x.shape[0]
    TB = x.shape[1]
    R = rho_w.shape[0]

    # z[r, k] accumulator starts at the bias; w[r, k] running product.
    z = jnp.broadcast_to(rho_b, (R, TB))
    w = jnp.ones((R, TB), dtype=jnp.float32)

    # Static unrolled loop over antecedents (A is small): pure VPU work into
    # lane-dense (R, TB) accumulators; fuses the z "matmul" with memberships.
    for n in range(A):
        xn = x[n:n + 1, :]                                    # (1, TB)
        z = z + rho_w[:, n:n + 1] * xn                        # (R, TB)
        rise = (xn - a[:, n:n + 1]) * inv_ba[:, n:n + 1]      # (R, TB)
        fall = (d[:, n:n + 1] - xn) * inv_dc[:, n:n + 1]      # (R, TB)
        w = w * jnp.clip(jnp.minimum(rise, fall), 0.0, 1.0)

    # Reduce over rules (sublane axis): diag[k] = sum_r z[r,k]*w[r,k].
    diag = jnp.sum(z * w, axis=0, keepdims=True)              # (1, TB)
    wsum = jnp.sum(w, axis=0, keepdims=True)                  # (1, TB)
    # Exact divide to hold the 1e-5 accuracy bar (only TB divides per step).
    out_ref[...] = diag / (wsum + 1e-13)


def fuzzy_neuron_forward(x, abcd, rho, *, tile_b=512):
    """Pallas-backed equivalent of FuzzyNeuron.forward.

    x:    (B, A)    float32
    abcd: (R, A, 4) float32
    rho:  (R, A+1)  float32
    returns (B,) float32
    """
    B, A = x.shape
    R = rho.shape[0]

    # ---- parameter setup (glue, batch independent) ----
    s = jnp.sort(abcd, axis=-1)                     # (R, A, 4)
    a = s[..., 0]                                   # (R, A)
    b = s[..., 1]
    c = s[..., 2]
    d = s[..., 3]
    inv_ba = 1.0 / (b - a)                          # precomputed slope recips
    inv_dc = 1.0 / (d - c)
    rho_w = rho[:, :A]                              # (R, A)
    rho_b = rho[:, A:]                              # (R, 1)

    # ---- batch tiling ----
    if B <= tile_b:
        TB = B                                      # block == full dim
        Bp = B
    else:
        TB = tile_b                                 # multiple of 128
        Bp = pl.cdiv(B, TB) * TB
    x_pad = x if Bp == B else jnp.pad(x, ((0, Bp - B), (0, 0)))
    x_t = jnp.transpose(x_pad, (1, 0))              # (A, Bp): batch on lanes
    nb = Bp // TB

    param_spec = pl.BlockSpec((R, A), lambda i: (0, 0))
    out = pl.pallas_call(
        _fuzzy_neuron_kernel,
        out_shape=jax.ShapeDtypeStruct((1, Bp), jnp.float32),
        grid_spec=pltpu.PrefetchScalarGridSpec(
            num_scalar_prefetch=0,
            grid=(nb,),
            in_specs=[
                pl.BlockSpec((A, TB), lambda i: (0, i)),   # x tile (streamed)
                param_spec,                                # rho_w  (resident)
                pl.BlockSpec((R, 1), lambda i: (0, 0)),    # rho_b  (resident)
                param_spec,                                # a
                param_spec,                                # inv_ba
                param_spec,                                # d
                param_spec,                                # inv_dc
            ],
            out_specs=pl.BlockSpec((1, TB), lambda i: (0, i)),
        ),
        compiler_params=pltpu.CompilerParams(
            dimension_semantics=("parallel",),             # 2 TCs on v7x
            vmem_limit_bytes=32 * 1024 * 1024,
        ),
    )(x_t, rho_w, rho_b, a, inv_ba, d, inv_dc)
    return out[0, :B]
    # TODO(synk): if R scales beyond ~128, add a second ("arbitrary") grid axis
    # over rule tiles with pl.when-guarded diag/wsum accumulators in scratch.


def fuzzy_neuron_reference(x, abcd, rho):
    """Pure-JAX reference mirroring the PyTorch loops (vectorized)."""
    B, A = x.shape
    s = jnp.sort(abcd, axis=-1)                                 # (R, A, 4)
    a, b, c, d = s[..., 0], s[..., 1], s[..., 2], s[..., 3]     # (R, A) each
    z = x @ rho[:, :A].T + rho[:, A][None, :]                   # (B, R)
    xe = x[None, :, :]                                          # (1, B, A)
    ants = jnp.clip(
        jnp.minimum((xe - a[:, None, :]) / (b - a)[:, None, :],
                    (d[:, None, :] - xe) / (d - c)[:, None, :]),
        0.0, 1.0)                                               # (R, B, A)
    w = jnp.prod(ants, axis=2)                                  # (R, B)
    diag = jnp.diag(z @ w)                                      # (B,)
    wsum = jnp.sum(w, axis=0)                                   # (B,)
    return diag / (wsum + 1e-13)


if __name__ == "__main__":
    # Small shapes consistent with the module: R rules, A antecedents, batch B.
    B, R, A = 8, 16, 8

    key = jax.random.PRNGKey(0)
    k_x, k_abcd, k_rho = jax.random.split(key, 3)

    # torch.rand -> uniform [0, 1); deterministic synthetic parameters.
    x = jax.random.uniform(k_x, (B, A), dtype=jnp.float32)
    abcd = jax.random.uniform(k_abcd, (R, A, 4), dtype=jnp.float32)
    rho = jax.random.uniform(k_rho, (R, A + 1), dtype=jnp.float32)

    out = jax.block_until_ready(fuzzy_neuron_forward(x, abcd, rho))
    ref = jax.block_until_ready(fuzzy_neuron_reference(x, abcd, rho))

    np.testing.assert_allclose(np.asarray(out), np.asarray(ref),
                               rtol=1e-5, atol=1e-5)
    assert out.shape == (B,)

    print("KERNEL_OK")
</pallas_src>

<mosaic_0001>
module attributes {stable_mosaic.version = 11 : i64} {
  func.func @_fuzzy_neuron_kernel(%arg0: i32, %arg1: memref<8x8xf32, #tpu.memory_space<vmem>>, %arg2: memref<16x8xf32, #tpu.memory_space<vmem>>, %arg3: memref<16x1xf32, #tpu.memory_space<vmem>>, %arg4: memref<16x8xf32, #tpu.memory_space<vmem>>, %arg5: memref<16x8xf32, #tpu.memory_space<vmem>>, %arg6: memref<16x8xf32, #tpu.memory_space<vmem>>, %arg7: memref<16x8xf32, #tpu.memory_space<vmem>>, %arg8: memref<1x8xf32, #tpu.memory_space<vmem>>) attributes {dimension_semantics = [#tpu.dimension_semantics<parallel>], iteration_bounds = array<i64: 1>, scalar_prefetch = 0 : i64, scratch_operands = 0 : i64, tpu.core_type = #tpu.core_type<tc>, window_params = [{transform_indices = @transform_0, window_bounds = array<i64: 8, 8>}, {pipeline_mode = #tpu.pipeline_mode<synchronous>, transform_indices = @transform_1, window_bounds = array<i64: 16, 8>}, {pipeline_mode = #tpu.pipeline_mode<synchronous>, transform_indices = @transform_2, window_bounds = array<i64: 16, 1>}, {pipeline_mode = #tpu.pipeline_mode<synchronous>, transform_indices = @transform_3, window_bounds = array<i64: 16, 8>}, {pipeline_mode = #tpu.pipeline_mode<synchronous>, transform_indices = @transform_4, window_bounds = array<i64: 16, 8>}, {pipeline_mode = #tpu.pipeline_mode<synchronous>, transform_indices = @transform_5, window_bounds = array<i64: 16, 8>}, {pipeline_mode = #tpu.pipeline_mode<synchronous>, transform_indices = @transform_6, window_bounds = array<i64: 16, 8>}, {transform_indices = @transform_7, window_bounds = array<i64: 1, 8>}]} {
    %c0 = arith.constant 0 : index
    %c0_0 = arith.constant 0 : index
    %0 = vector.load %arg1[%c0, %c0_0] : memref<8x8xf32, #tpu.memory_space<vmem>>, vector<8x8xf32>
    %c0_1 = arith.constant 0 : index
    %c0_2 = arith.constant 0 : index
    %1 = vector.load %arg2[%c0_1, %c0_2] : memref<16x8xf32, #tpu.memory_space<vmem>>, vector<16x8xf32>
    %c0_3 = arith.constant 0 : index
    %c0_4 = arith.constant 0 : index
    %2 = vector.load %arg3[%c0_3, %c0_4] : memref<16x1xf32, #tpu.memory_space<vmem>>, vector<16x1xf32>
    %c0_5 = arith.constant 0 : index
    %c0_6 = arith.constant 0 : index
    %3 = vector.load %arg4[%c0_5, %c0_6] : memref<16x8xf32, #tpu.memory_space<vmem>>, vector<16x8xf32>
    %c0_7 = arith.constant 0 : index
    %c0_8 = arith.constant 0 : index
    %4 = vector.load %arg5[%c0_7, %c0_8] : memref<16x8xf32, #tpu.memory_space<vmem>>, vector<16x8xf32>
    %c0_9 = arith.constant 0 : index
    %c0_10 = arith.constant 0 : index
    %5 = vector.load %arg6[%c0_9, %c0_10] : memref<16x8xf32, #tpu.memory_space<vmem>>, vector<16x8xf32>
    %c0_11 = arith.constant 0 : index
    %c0_12 = arith.constant 0 : index
    %6 = vector.load %arg7[%c0_11, %c0_12] : memref<16x8xf32, #tpu.memory_space<vmem>>, vector<16x8xf32>
    %7 = vector.shape_cast %2 : vector<16x1xf32> to vector<16x1xf32>
    %8 = vector.broadcast %7 : vector<16x1xf32> to vector<16x8xf32>
    %cst = arith.constant 1.000000e+00 : f32
    %9 = vector.broadcast %cst : f32 to vector<16x8xf32>
    %10 = vector.extract_strided_slice %0 {offsets = [0, 0], sizes = [1, 8], strides = [1, 1]} : vector<8x8xf32> to vector<1x8xf32>
    %11 = vector.extract_strided_slice %1 {offsets = [0, 0], sizes = [16, 1], strides = [1, 1]} : vector<16x8xf32> to vector<16x1xf32>
    %12 = vector.broadcast %11 : vector<16x1xf32> to vector<16x8xf32>
    %13 = vector.broadcast %10 : vector<1x8xf32> to vector<16x8xf32>
    %14 = arith.mulf %12, %13 : vector<16x8xf32>
    %15 = arith.addf %8, %14 : vector<16x8xf32>
    %16 = vector.extract_strided_slice %3 {offsets = [0, 0], sizes = [16, 1], strides = [1, 1]} : vector<16x8xf32> to vector<16x1xf32>
    %17 = vector.broadcast %10 : vector<1x8xf32> to vector<16x8xf32>
    %18 = vector.broadcast %16 : vector<16x1xf32> to vector<16x8xf32>
    %19 = arith.subf %17, %18 : vector<16x8xf32>
    %20 = vector.extract_strided_slice %4 {offsets = [0, 0], sizes = [16, 1], strides = [1, 1]} : vector<16x8xf32> to vector<16x1xf32>
    %21 = vector.broadcast %20 : vector<16x1xf32> to vector<16x8xf32>
    %22 = arith.mulf %19, %21 : vector<16x8xf32>
    %23 = vector.extract_strided_slice %5 {offsets = [0, 0], sizes = [16, 1], strides = [1, 1]} : vector<16x8xf32> to vector<16x1xf32>
    %24 = vector.broadcast %23 : vector<16x1xf32> to vector<16x8xf32>
    %25 = vector.broadcast %10 : vector<1x8xf32> to vector<16x8xf32>
    %26 = arith.subf %24, %25 : vector<16x8xf32>
    %27 = vector.extract_strided_slice %6 {offsets = [0, 0], sizes = [16, 1], strides = [1, 1]} : vector<16x8xf32> to vector<16x1xf32>
    %28 = vector.broadcast %27 : vector<16x1xf32> to vector<16x8xf32>
    %29 = arith.mulf %26, %28 : vector<16x8xf32>
    %30 = arith.minimumf %22, %29 : vector<16x8xf32>
    %cst_13 = arith.constant 0.000000e+00 : f32
    %cst_14 = arith.constant 1.000000e+00 : f32
    %31 = vector.broadcast %cst_13 : f32 to vector<16x8xf32>
    %32 = arith.maximumf %31, %30 : vector<16x8xf32>
    %33 = vector.broadcast %cst_14 : f32 to vector<16x8xf32>
    %34 = arith.minimumf %33, %32 : vector<16x8xf32>
    %35 = arith.mulf %9, %34 : vector<16x8xf32>
    %36 = vector.extract_strided_slice %0 {offsets = [1, 0], sizes = [1, 8], strides = [1, 1]} : vector<8x8xf32> to vector<1x8xf32>
    %37 = vector.extract_strided_slice %1 {offsets = [0, 1], sizes = [16, 1], strides = [1, 1]} : vector<16x8xf32> to vector<16x1xf32>
    %38 = vector.broadcast %37 : vector<16x1xf32> to vector<16x8xf32>
    %39 = vector.broadcast %36 : vector<1x8xf32> to vector<16x8xf32>
    %40 = arith.mulf %38, %39 : vector<16x8xf32>
    %41 = arith.addf %15, %40 : vector<16x8xf32>
    %42 = vector.extract_strided_slice %3 {offsets = [0, 1], sizes = [16, 1], strides = [1, 1]} : vector<16x8xf32> to vector<16x1xf32>
    %43 = vector.broadcast %36 : vector<1x8xf32> to vector<16x8xf32>
    %44 = vector.broadcast %42 : vector<16x1xf32> to vector<16x8xf32>
    %45 = arith.subf %43, %44 : vector<16x8xf32>
    %46 = vector.extract_strided_slice %4 {offsets = [0, 1], sizes = [16, 1], strides = [1, 1]} : vector<16x8xf32> to vector<16x1xf32>
    %47 = vector.broadcast %46 : vector<16x1xf32> to vector<16x8xf32>
    %48 = arith.mulf %45, %47 : vector<16x8xf32>
    %49 = vector.extract_strided_slice %5 {offsets = [0, 1], sizes = [16, 1], strides = [1, 1]} : vector<16x8xf32> to vector<16x1xf32>
    %50 = vector.broadcast %49 : vector<16x1xf32> to vector<16x8xf32>
    %51 = vector.broadcast %36 : vector<1x8xf32> to vector<16x8xf32>
    %52 = arith.subf %50, %51 : vector<16x8xf32>
    %53 = vector.extract_strided_slice %6 {offsets = [0, 1], sizes = [16, 1], strides = [1, 1]} : vector<16x8xf32> to vector<16x1xf32>
    %54 = vector.broadcast %53 : vector<16x1xf32> to vector<16x8xf32>
    %55 = arith.mulf %52, %54 : vector<16x8xf32>
    %56 = arith.minimumf %48, %55 : vector<16x8xf32>
    %cst_15 = arith.constant 0.000000e+00 : f32
    %cst_16 = arith.constant 1.000000e+00 : f32
    %57 = vector.broadcast %cst_15 : f32 to vector<16x8xf32>
    %58 = arith.maximumf %57, %56 : vector<16x8xf32>
    %59 = vector.broadcast %cst_16 : f32 to vector<16x8xf32>
    %60 = arith.minimumf %59, %58 : vector<16x8xf32>
    %61 = arith.mulf %35, %60 : vector<16x8xf32>
    %62 = vector.extract_strided_slice %0 {offsets = [2, 0], sizes = [1, 8], strides = [1, 1]} : vector<8x8xf32> to vector<1x8xf32>
    %63 = vector.extract_strided_slice %1 {offsets = [0, 2], sizes = [16, 1], strides = [1, 1]} : vector<16x8xf32> to vector<16x1xf32>
    %64 = vector.broadcast %63 : vector<16x1xf32> to vector<16x8xf32>
    %65 = vector.broadcast %62 : vector<1x8xf32> to vector<16x8xf32>
    %66 = arith.mulf %64, %65 : vector<16x8xf32>
    %67 = arith.addf %41, %66 : vector<16x8xf32>
    %68 = vector.extract_strided_slice %3 {offsets = [0, 2], sizes = [16, 1], strides = [1, 1]} : vector<16x8xf32> to vector<16x1xf32>
    %69 = vector.broadcast %62 : vector<1x8xf32> to vector<16x8xf32>
    %70 = vector.broadcast %68 : vector<16x1xf32> to vector<16x8xf32>
    %71 = arith.subf %69, %70 : vector<16x8xf32>
    %72 = vector.extract_strided_slice %4 {offsets = [0, 2], sizes = [16, 1], strides = [1, 1]} : vector<16x8xf32> to vector<16x1xf32>
    %73 = vector.broadcast %72 : vector<16x1xf32> to vector<16x8xf32>
    %74 = arith.mulf %71, %73 : vector<16x8xf32>
    %75 = vector.extract_strided_slice %5 {offsets = [0, 2], sizes = [16, 1], strides = [1, 1]} : vector<16x8xf32> to vector<16x1xf32>
    %76 = vector.broadcast %75 : vector<16x1xf32> to vector<16x8xf32>
    %77 = vector.broadcast %62 : vector<1x8xf32> to vector<16x8xf32>
    %78 = arith.subf %76, %77 : vector<16x8xf32>
    %79 = vector.extract_strided_slice %6 {offsets = [0, 2], sizes = [16, 1], strides = [1, 1]} : vector<16x8xf32> to vector<16x1xf32>
    %80 = vector.broadcast %79 : vector<16x1xf32> to vector<16x8xf32>
    %81 = arith.mulf %78, %80 : vector<16x8xf32>
    %82 = arith.minimumf %74, %81 : vector<16x8xf32>
    %cst_17 = arith.constant 0.000000e+00 : f32
    %cst_18 = arith.constant 1.000000e+00 : f32
    %83 = vector.broadcast %cst_17 : f32 to vector<16x8xf32>
    %84 = arith.maximumf %83, %82 : vector<16x8xf32>
    %85 = vector.broadcast %cst_18 : f32 to vector<16x8xf32>
    %86 = arith.minimumf %85, %84 : vector<16x8xf32>
    %87 = arith.mulf %61, %86 : vector<16x8xf32>
    %88 = vector.extract_strided_slice %0 {offsets = [3, 0], sizes = [1, 8], strides = [1, 1]} : vector<8x8xf32> to vector<1x8xf32>
    %89 = vector.extract_strided_slice %1 {offsets = [0, 3], sizes = [16, 1], strides = [1, 1]} : vector<16x8xf32> to vector<16x1xf32>
    %90 = vector.broadcast %89 : vector<16x1xf32> to vector<16x8xf32>
    %91 = vector.broadcast %88 : vector<1x8xf32> to vector<16x8xf32>
    %92 = arith.mulf %90, %91 : vector<16x8xf32>
    %93 = arith.addf %67, %92 : vector<16x8xf32>
    %94 = vector.extract_strided_slice %3 {offsets = [0, 3], sizes = [16, 1], strides = [1, 1]} : vector<16x8xf32> to vector<16x1xf32>
    %95 = vector.broadcast %88 : vector<1x8xf32> to vector<16x8xf32>
    %96 = vector.broadcast %94 : vector<16x1xf32> to vector<16x8xf32>
    %97 = arith.subf %95, %96 : vector<16x8xf32>
    %98 = vector.extract_strided_slice %4 {offsets = [0, 3], sizes = [16, 1], strides = [1, 1]} : vector<16x8xf32> to vector<16x1xf32>
    %99 = vector.broadcast %98 : vector<16x1xf32> to vector<16x8xf32>
    %100 = arith.mulf %97, %99 : vector<16x8xf32>
    %101 = vector.extract_strided_slice %5 {offsets = [0, 3], sizes = [16, 1], strides = [1, 1]} : vector<16x8xf32> to vector<16x1xf32>
    %102 = vector.broadcast %101 : vector<16x1xf32> to vector<16x8xf32>
    %103 = vector.broadcast %88 : vector<1x8xf32> to vector<16x8xf32>
    %104 = arith.subf %102, %103 : vector<16x8xf32>
    %105 = vector.extract_strided_slice %6 {offsets = [0, 3], sizes = [16, 1], strides = [1, 1]} : vector<16x8xf32> to vector<16x1xf32>
    %106 = vector.broadcast %105 : vector<16x1xf32> to vector<16x8xf32>
    %107 = arith.mulf %104, %106 : vector<16x8xf32>
    %108 = arith.minimumf %100, %107 : vector<16x8xf32>
    %cst_19 = arith.constant 0.000000e+00 : f32
    %cst_20 = arith.constant 1.000000e+00 : f32
    %109 = vector.broadcast %cst_19 : f32 to vector<16x8xf32>
    %110 = arith.maximumf %109, %108 : vector<16x8xf32>
    %111 = vector.broadcast %cst_20 : f32 to vector<16x8xf32>
    %112 = arith.minimumf %111, %110 : vector<16x8xf32>
    %113 = arith.mulf %87, %112 : vector<16x8xf32>
    %114 = vector.extract_strided_slice %0 {offsets = [4, 0], sizes = [1, 8], strides = [1, 1]} : vector<8x8xf32> to vector<1x8xf32>
    %115 = vector.extract_strided_slice %1 {offsets = [0, 4], sizes = [16, 1], strides = [1, 1]} : vector<16x8xf32> to vector<16x1xf32>
    %116 = vector.broadcast %115 : vector<16x1xf32> to vector<16x8xf32>
    %117 = vector.broadcast %114 : vector<1x8xf32> to vector<16x8xf32>
    %118 = arith.mulf %116, %117 : vector<16x8xf32>
    %119 = arith.addf %93, %118 : vector<16x8xf32>
    %120 = vector.extract_strided_slice %3 {offsets = [0, 4], sizes = [16, 1], strides = [1, 1]} : vector<16x8xf32> to vector<16x1xf32>
    %121 = vector.broadcast %114 : vector<1x8xf32> to vector<16x8xf32>
    %122 = vector.broadcast %120 : vector<16x1xf32> to vector<16x8xf32>
    %123 = arith.subf %121, %122 : vector<16x8xf32>
    %124 = vector.extract_strided_slice %4 {offsets = [0, 4], sizes = [16, 1], strides = [1, 1]} : vector<16x8xf32> to vector<16x1xf32>
    %125 = vector.broadcast %124 : vector<16x1xf32> to vector<16x8xf32>
    %126 = arith.mulf %123, %125 : vector<16x8xf32>
    %127 = vector.extract_strided_slice %5 {offsets = [0, 4], sizes = [16, 1], strides = [1, 1]} : vector<16x8xf32> to vector<16x1xf32>
    %128 = vector.broadcast %127 : vector<16x1xf32> to vector<16x8xf32>
    %129 = vector.broadcast %114 : vector<1x8xf32> to vector<16x8xf32>
    %130 = arith.subf %128, %129 : vector<16x8xf32>
    %131 = vector.extract_strided_slice %6 {offsets = [0, 4], sizes = [16, 1], strides = [1, 1]} : vector<16x8xf32> to vector<16x1xf32>
    %132 = vector.broadcast %131 : vector<16x1xf32> to vector<16x8xf32>
    %133 = arith.mulf %130, %132 : vector<16x8xf32>
    %134 = arith.minimumf %126, %133 : vector<16x8xf32>
    %cst_21 = arith.constant 0.000000e+00 : f32
    %cst_22 = arith.constant 1.000000e+00 : f32
    %135 = vector.broadcast %cst_21 : f32 to vector<16x8xf32>
    %136 = arith.maximumf %135, %134 : vector<16x8xf32>
    %137 = vector.broadcast %cst_22 : f32 to vector<16x8xf32>
    %138 = arith.minimumf %137, %136 : vector<16x8xf32>
    %139 = arith.mulf %113, %138 : vector<16x8xf32>
    %140 = vector.extract_strided_slice %0 {offsets = [5, 0], sizes = [1, 8], strides = [1, 1]} : vector<8x8xf32> to vector<1x8xf32>
    %141 = vector.extract_strided_slice %1 {offsets = [0, 5], sizes = [16, 1], strides = [1, 1]} : vector<16x8xf32> to vector<16x1xf32>
    %142 = vector.broadcast %141 : vector<16x1xf32> to vector<16x8xf32>
    %143 = vector.broadcast %140 : vector<1x8xf32> to vector<16x8xf32>
    %144 = arith.mulf %142, %143 : vector<16x8xf32>
    %145 = arith.addf %119, %144 : vector<16x8xf32>
    %146 = vector.extract_strided_slice %3 {offsets = [0, 5], sizes = [16, 1], strides = [1, 1]} : vector<16x8xf32> to vector<16x1xf32>
    %147 = vector.broadcast %140 : vector<1x8xf32> to vector<16x8xf32>
    %148 = vector.broadcast %146 : vector<16x1xf32> to vector<16x8xf32>
    %149 = arith.subf %147, %148 : vector<16x8xf32>
    %150 = vector.extract_strided_slice %4 {offsets = [0, 5], sizes = [16, 1], strides = [1, 1]} : vector<16x8xf32> to vector<16x1xf32>
    %151 = vector.broadcast %150 : vector<16x1xf32> to vector<16x8xf32>
    %152 = arith.mulf %149, %151 : vector<16x8xf32>
    %153 = vector.extract_strided_slice %5 {offsets = [0, 5], sizes = [16, 1], strides = [1, 1]} : vector<16x8xf32> to vector<16x1xf32>
    %154 = vector.broadcast %153 : vector<16x1xf32> to vector<16x8xf32>
    %155 = vector.broadcast %140 : vector<1x8xf32> to vector<16x8xf32>
    %156 = arith.subf %154, %155 : vector<16x8xf32>
    %157 = vector.extract_strided_slice %6 {offsets = [0, 5], sizes = [16, 1], strides = [1, 1]} : vector<16x8xf32> to vector<16x1xf32>
    %158 = vector.broadcast %157 : vector<16x1xf32> to vector<16x8xf32>
    %159 = arith.mulf %156, %158 : vector<16x8xf32>
    %160 = arith.minimumf %152, %159 : vector<16x8xf32>
    %cst_23 = arith.constant 0.000000e+00 : f32
    %cst_24 = arith.constant 1.000000e+00 : f32
    %161 = vector.broadcast %cst_23 : f32 to vector<16x8xf32>
    %162 = arith.maximumf %161, %160 : vector<16x8xf32>
    %163 = vector.broadcast %cst_24 : f32 to vector<16x8xf32>
    %164 = arith.minimumf %163, %162 : vector<16x8xf32>
    %165 = arith.mulf %139, %164 : vector<16x8xf32>
    %166 = vector.extract_strided_slice %0 {offsets = [6, 0], sizes = [1, 8], strides = [1, 1]} : vector<8x8xf32> to vector<1x8xf32>
    %167 = vector.extract_strided_slice %1 {offsets = [0, 6], sizes = [16, 1], strides = [1, 1]} : vector<16x8xf32> to vector<16x1xf32>
    %168 = vector.broadcast %167 : vector<16x1xf32> to vector<16x8xf32>
    %169 = vector.broadcast %166 : vector<1x8xf32> to vector<16x8xf32>
    %170 = arith.mulf %168, %169 : vector<16x8xf32>
    %171 = arith.addf %145, %170 : vector<16x8xf32>
    %172 = vector.extract_strided_slice %3 {offsets = [0, 6], sizes = [16, 1], strides = [1, 1]} : vector<16x8xf32> to vector<16x1xf32>
    %173 = vector.broadcast %166 : vector<1x8xf32> to vector<16x8xf32>
    %174 = vector.broadcast %172 : vector<16x1xf32> to vector<16x8xf32>
    %175 = arith.subf %173, %174 : vector<16x8xf32>
    %176 = vector.extract_strided_slice %4 {offsets = [0, 6], sizes = [16, 1], strides = [1, 1]} : vector<16x8xf32> to vector<16x1xf32>
    %177 = vector.broadcast %176 : vector<16x1xf32> to vector<16x8xf32>
    %178 = arith.mulf %175, %177 : vector<16x8xf32>
    %179 = vector.extract_strided_slice %5 {offsets = [0, 6], sizes = [16, 1], strides = [1, 1]} : vector<16x8xf32> to vector<16x1xf32>
    %180 = vector.broadcast %179 : vector<16x1xf32> to vector<16x8xf32>
    %181 = vector.broadcast %166 : vector<1x8xf32> to vector<16x8xf32>
    %182 = arith.subf %180, %181 : vector<16x8xf32>
    %183 = vector.extract_strided_slice %6 {offsets = [0, 6], sizes = [16, 1], strides = [1, 1]} : vector<16x8xf32> to vector<16x1xf32>
    %184 = vector.broadcast %183 : vector<16x1xf32> to vector<16x8xf32>
    %185 = arith.mulf %182, %184 : vector<16x8xf32>
    %186 = arith.minimumf %178, %185 : vector<16x8xf32>
    %cst_25 = arith.constant 0.000000e+00 : f32
    %cst_26 = arith.constant 1.000000e+00 : f32
    %187 = vector.broadcast %cst_25 : f32 to vector<16x8xf32>
    %188 = arith.maximumf %187, %186 : vector<16x8xf32>
    %189 = vector.broadcast %cst_26 : f32 to vector<16x8xf32>
    %190 = arith.minimumf %189, %188 : vector<16x8xf32>
    %191 = arith.mulf %165, %190 : vector<16x8xf32>
    %192 = vector.extract_strided_slice %0 {offsets = [7, 0], sizes = [1, 8], strides = [1, 1]} : vector<8x8xf32> to vector<1x8xf32>
    %193 = vector.extract_strided_slice %1 {offsets = [0, 7], sizes = [16, 1], strides = [1, 1]} : vector<16x8xf32> to vector<16x1xf32>
    %194 = vector.broadcast %193 : vector<16x1xf32> to vector<16x8xf32>
    %195 = vector.broadcast %192 : vector<1x8xf32> to vector<16x8xf32>
    %196 = arith.mulf %194, %195 : vector<16x8xf32>
    %197 = arith.addf %171, %196 : vector<16x8xf32>
    %198 = vector.extract_strided_slice %3 {offsets = [0, 7], sizes = [16, 1], strides = [1, 1]} : vector<16x8xf32> to vector<16x1xf32>
    %199 = vector.broadcast %192 : vector<1x8xf32> to vector<16x8xf32>
    %200 = vector.broadcast %198 : vector<16x1xf32> to vector<16x8xf32>
    %201 = arith.subf %199, %200 : vector<16x8xf32>
    %202 = vector.extract_strided_slice %4 {offsets = [0, 7], sizes = [16, 1], strides = [1, 1]} : vector<16x8xf32> to vector<16x1xf32>
    %203 = vector.broadcast %202 : vector<16x1xf32> to vector<16x8xf32>
    %204 = arith.mulf %201, %203 : vector<16x8xf32>
    %205 = vector.extract_strided_slice %5 {offsets = [0, 7], sizes = [16, 1], strides = [1, 1]} : vector<16x8xf32> to vector<16x1xf32>
    %206 = vector.broadcast %205 : vector<16x1xf32> to vector<16x8xf32>
    %207 = vector.broadcast %192 : vector<1x8xf32> to vector<16x8xf32>
    %208 = arith.subf %206, %207 : vector<16x8xf32>
    %209 = vector.extract_strided_slice %6 {offsets = [0, 7], sizes = [16, 1], strides = [1, 1]} : vector<16x8xf32> to vector<16x1xf32>
    %210 = vector.broadcast %209 : vector<16x1xf32> to vector<16x8xf32>
    %211 = arith.mulf %208, %210 : vector<16x8xf32>
    %212 = arith.minimumf %204, %211 : vector<16x8xf32>
    %cst_27 = arith.constant 0.000000e+00 : f32
    %cst_28 = arith.constant 1.000000e+00 : f32
    %213 = vector.broadcast %cst_27 : f32 to vector<16x8xf32>
    %214 = arith.maximumf %213, %212 : vector<16x8xf32>
    %215 = vector.broadcast %cst_28 : f32 to vector<16x8xf32>
    %216 = arith.minimumf %215, %214 : vector<16x8xf32>
    %217 = arith.mulf %191, %216 : vector<16x8xf32>
    %218 = arith.mulf %197, %217 : vector<16x8xf32>
    %cst_29 = arith.constant dense<0.000000e+00> : vector<8xf32>
    %219 = vector.multi_reduction <add>, %218, %cst_29 [0] : vector<16x8xf32> to vector<8xf32>
    %220 = vector.shape_cast %219 : vector<8xf32> to vector<1x8xf32>
    %cst_30 = arith.constant dense<0.000000e+00> : vector<8xf32>
    %221 = vector.multi_reduction <add>, %217, %cst_30 [0] : vector<16x8xf32> to vector<8xf32>
    %222 = vector.shape_cast %221 : vector<8xf32> to vector<1x8xf32>
    %cst_31 = arith.constant 9.99999982E-14 : f32
    %223 = vector.broadcast %cst_31 : f32 to vector<1x8xf32>
    %224 = arith.addf %222, %223 : vector<1x8xf32>
    %225 = arith.divf %220, %224 : vector<1x8xf32>
    %c0_32 = arith.constant 0 : index
    %c0_33 = arith.constant 0 : index
    %226 = vector.load %arg8[%c0_32, %c0_33] : memref<1x8xf32, #tpu.memory_space<vmem>>, vector<1x8xf32>
    tpu.vector_store %arg8[%c0_32, %c0_33], %225 {strides = array<i32>} : memref<1x8xf32, #tpu.memory_space<vmem>>, vector<1x8xf32>,
    return
  }
  func.func @transform_0(%arg0: i32) -> (i32, i32) {
    %c0_i32 = arith.constant 0 : i32
    %c0_i32_0 = arith.constant 0 : i32
    return %c0_i32, %arg0 : i32, i32
  }
  func.func @transform_1(%arg0: i32) -> (i32, i32) {
    %c0_i32 = arith.constant 0 : i32
    %c0_i32_0 = arith.constant 0 : i32
    %c0_i32_1 = arith.constant 0 : i32
    return %c0_i32, %c0_i32_0 : i32, i32
  }
  func.func @transform_2(%arg0: i32) -> (i32, i32) {
    %c0_i32 = arith.constant 0 : i32
    %c0_i32_0 = arith.constant 0 : i32
    %c0_i32_1 = arith.constant 0 : i32
    return %c0_i32, %c0_i32_0 : i32, i32
  }
  func.func @transform_3(%arg0: i32) -> (i32, i32) {
    %c0_i32 = arith.constant 0 : i32
    %c0_i32_0 = arith.constant 0 : i32
    %c0_i32_1 = arith.constant 0 : i32
    return %c0_i32, %c0_i32_0 : i32, i32
  }
  func.func @transform_4(%arg0: i32) -> (i32, i32) {
    %c0_i32 = arith.constant 0 : i32
    %c0_i32_0 = arith.constant 0 : i32
    %c0_i32_1 = arith.constant 0 : i32
    return %c0_i32, %c0_i32_0 : i32, i32
  }
  func.func @transform_5(%arg0: i32) -> (i32, i32) {
    %c0_i32 = arith.constant 0 : i32
    %c0_i32_0 = arith.constant 0 : i32
    %c0_i32_1 = arith.constant 0 : i32
    return %c0_i32, %c0_i32_0 : i32, i32
  }
  func.func @transform_6(%arg0: i32) -> (i32, i32) {
    %c0_i32 = arith.constant 0 : i32
    %c0_i32_0 = arith.constant 0 : i32
    %c0_i32_1 = arith.constant 0 : i32
    return %c0_i32, %c0_i32_0 : i32, i32
  }
  func.func @transform_7(%arg0: i32) -> (i32, i32) {
    %c0_i32 = arith.constant 0 : i32
    %c0_i32_0 = arith.constant 0 : i32
    return %c0_i32, %arg0 : i32, i32
  }
}

</mosaic_0001>

<llo_original>
// kernel: tpu_custom_call.1
$region0: #{tpu_custom_call.1}
  #allocation0 [shape = 'u32[]', space=smem, size = 0x4, offset = 0x4, fixed_abs, tag = 'smem constant byte address 0x4 - core index']
  #allocation1 [shape = 'u32[144,128]{1,0:T(1,128)}', space=vmem, size = 0x12000, scoped, tag = 'internal scratch']
  %s0 = inlined_call_operand.vmem [shape: f32[8,8], index: 0, kind: input, shape index: {}]
  %s1 = inlined_call_operand.vmem [shape: f32[16,8], index: 1, kind: input, shape index: {}]
  %s2 = inlined_call_operand.vmem [shape: f32[16,1], index: 2, kind: input, shape index: {}]
  %s3 = inlined_call_operand.vmem [shape: f32[16,8], index: 3, kind: input, shape index: {}]
  %s4 = inlined_call_operand.vmem [shape: f32[16,8], index: 4, kind: input, shape index: {}]
  %s5 = inlined_call_operand.vmem [shape: f32[16,8], index: 5, kind: input, shape index: {}]
  %s6 = inlined_call_operand.vmem [shape: f32[16,8], index: 6, kind: input, shape index: {}]
  %s7 = inlined_call_operand.hbm [shape: f32[1,8], index: 7, kind: output, shape index: {}]
  %s8 = sld [smem:[#allocation0]]
  $region38: #{tpu_custom_call.1} parent=0
    _
  %s10 = ssub.s32 1, %s8
  %s11 = scalar_select 0, %s10, %s8
  $region1: #{tpu_custom_call.1} parent=0
    #allocation2 [shape = 'u8[512]{0}', space=vmem, size = 0x400, scoped, tag = 'output window, operand 0, single buffered']
    #allocation3 [shape = 's32[1]{0}', space=sflag, size = 0x4, scoped, tag = 'scoped memory for tpu_custom_call.1']
    %12 = vsyncpa [#allocation3], 0
    // Predicated region
    $region2: #{tpu_custom_call.1} parent=1 // pred_check
      _
    $region3: #{tpu_custom_call.1} parent=1 // pred_check_branch
      %14 = sbr.rel (0) target = $region5
    $region4: #{tpu_custom_call.1} parent=1 // pred_region
      _
    $region5: #{tpu_custom_call.1} parent=1 // pred_fallthru
      _
    // Predicated region
    $region6: #{tpu_custom_call.1} parent=1 // pred_check
      _
    $region7: #{tpu_custom_call.1} parent=1 // pred_check_branch
      %16 = sbr.rel (0) target = $region9
    $region8: #{tpu_custom_call.1} parent=1 // pred_region
      _
    $region9: #{tpu_custom_call.1} parent=1 // pred_fallthru
      _
    // Predicated region
    $region10: #{tpu_custom_call.1} parent=1 // pred_check
      _
    $region11: #{tpu_custom_call.1} parent=1 // pred_check_branch
      %18 = sbr.rel (0) target = $region13
    $region12: #{tpu_custom_call.1} parent=1 // pred_region
      _
    $region13: #{tpu_custom_call.1} parent=1 // pred_fallthru
      _
    // Predicated region
    $region14: #{tpu_custom_call.1} parent=1 // pred_check
      _
    $region15: #{tpu_custom_call.1} parent=1 // pred_check_branch
      %20 = sbr.rel (0) target = $region17
    $region16: #{tpu_custom_call.1} parent=1 // pred_region
      _
    $region17: #{tpu_custom_call.1} parent=1 // pred_fallthru
      _
    // Predicated region
    $region18: #{tpu_custom_call.1} parent=1 // pred_check
      _
    $region19: #{tpu_custom_call.1} parent=1 // pred_check_branch
      %22 = sbr.rel (0) target = $region21
    $region20: #{tpu_custom_call.1} parent=1 // pred_region
      _
    $region21: #{tpu_custom_call.1} parent=1 // pred_fallthru
      _
    // Predicated region
    $region22: #{tpu_custom_call.1} parent=1 // pred_check
      _
    $region23: #{tpu_custom_call.1} parent=1 // pred_check_branch
      %24 = sbr.rel (0) target = $region25
    $region24: #{tpu_custom_call.1} parent=1 // pred_region
      _
    $region25: #{tpu_custom_call.1} parent=1 // pred_fallthru
      _
    // Predicated region
    $region26: #{tpu_custom_call.1} parent=1 // pred_check
      _
    $region27: #{tpu_custom_call.1} parent=1 // pred_check_branch
      %26 = sbr.rel (0) target = $region29
    $region28: #{tpu_custom_call.1} parent=1 // pred_region
      _
    $region29: #{tpu_custom_call.1} parent=1 // pred_fallthru
      _
    %v27 = vld [vmem:[%s0] sm:$0xff]
    %v28 = vld [vmem:[%s1] sm:$0xff]
    %v29 = vld [vmem:[%s1 + $0x8] sm:$0xff]
    %v30 = vld [vmem:[%s2] sm:$0xff]
    %v31 = vld [vmem:[%s2 + $0x8] sm:$0xff]
    %v32 = vld [vmem:[%s3] sm:$0xff]
    %v33 = vld [vmem:[%s3 + $0x8] sm:$0xff]
    %v34 = vld [vmem:[%s4] sm:$0xff]
    %v35 = vld [vmem:[%s4 + $0x8] sm:$0xff]
    %v36 = vld [vmem:[%s5] sm:$0xff]
    %v37 = vld [vmem:[%s5 + $0x8] sm:$0xff]
    %v38 = vld [vmem:[%s6] sm:$0xff]
    %v39 = vld [vmem:[%s6 + $0x8] sm:$0xff]
    %41 = vset.pattern.permute.xlu0 0
    %42 = vperm.xlu0 %41, %v30
    %v43 = vpop.permute.xlu0 %42
    %46 = vset.pattern.permute.xlu0 0
    %47 = vperm.xlu0 %46, %v31
    %v48 = vpop.permute.xlu0 %47
    %51 = vset.pattern.permute.xlu0 0
    %52 = vperm.xlu0 %51, %v28
    %v53 = vpop.permute.xlu0 %52
    %56 = vset.pattern.permute.xlu0 0
    %57 = vperm.xlu0 %56, %v29
    %v58 = vpop.permute.xlu0 %57
    %v60 = vlaneseq
    %v61 = vshrl.u32 %v60, 7
    %v62 = vsub.s32 0, %v61
    %v63 = vrot.slane %v27, %v62
    %v64 = vmul.f32 %v53, %v63
    %v65 = vmul.f32 %v58, %v63
    %v66 = vadd.f32 %v43, %v64
    %v67 = vadd.f32 %v48, %v65
    %69 = vset.pattern.permute.xlu0 0
    %70 = vperm.xlu0 %69, %v32
    %v71 = vpop.permute.xlu0 %70
    %74 = vset.pattern.permute.xlu0 0
    %75 = vperm.xlu0 %74, %v33
    %v76 = vpop.permute.xlu0 %75
    %v78 = vsub.f32 %v63, %v71
    %v79 = vsub.f32 %v63, %v76
    %81 = vset.pattern.permute.xlu0 0
    %82 = vperm.xlu0 %81, %v34
    %v83 = vpop.permute.xlu0 %82
    %86 = vset.pattern.permute.xlu0 0
    %87 = vperm.xlu0 %86, %v35
    %v88 = vpop.permute.xlu0 %87
    %v90 = vmul.f32 %v78, %v83
    %v91 = vmul.f32 %v79, %v88
    %93 = vset.pattern.permute.xlu0 0
    %94 = vperm.xlu0 %93, %v36
    %v95 = vpop.permute.xlu0 %94
    %98 = vset.pattern.permute.xlu0 0
    %99 = vperm.xlu0 %98, %v37
    %v100 = vpop.permute.xlu0 %99
    %v102 = vsub.f32 %v95, %v63
    %v103 = vsub.f32 %v100, %v63
    %105 = vset.pattern.permute.xlu0 0
    %106 = vperm.xlu0 %105, %v38
    %v107 = vpop.permute.xlu0 %106
    %110 = vset.pattern.permute.xlu0 0
    %111 = vperm.xlu0 %110, %v39
    %v112 = vpop.permute.xlu0 %111
    %v114 = vmul.f32 %v102, %v107
    %v115 = vmul.f32 %v103, %v112
    %v116 = vmin.f32 %v90, %v114
    %v117 = vmin.f32 %v91, %v115
    %v118 = vmax.f32 %v116, 0.0
    %v119 = vmax.f32 %v117, 0.0
    %v120 = vmin.f32 %v118, 1.0
    %v121 = vmin.f32 %v119, 1.0
    %122 = vset.pattern.permute.xlu0 1
    %123 = vperm.xlu0 %122, %v28
    %v124 = vpop.permute.xlu0 %123
    %126 = vset.pattern.permute.xlu0 1
    %127 = vperm.xlu0 %126, %v29
    %v128 = vpop.permute.xlu0 %127
    %v130 = vlaneseq
    %v131 = vshrl.u32 %v130, 7
    %v132 = vsub.s32 1, %v131
    %v133 = vrot.slane %v27, %v132
    %v134 = vmul.f32 %v124, %v133
    %v135 = vmul.f32 %v128, %v133
    %v136 = vadd.f32 %v66, %v134
    %v137 = vadd.f32 %v67, %v135
    %138 = vset.pattern.permute.xlu0 1
    %139 = vperm.xlu0 %138, %v32
    %v140 = vpop.permute.xlu0 %139
    %142 = vset.pattern.permute.xlu0 1
    %143 = vperm.xlu0 %142, %v33
    %v144 = vpop.permute.xlu0 %143
    %v146 = vsub.f32 %v133, %v140
    %v147 = vsub.f32 %v133, %v144
    %148 = vset.pattern.permute.xlu0 1
    %149 = vperm.xlu0 %148, %v34
    %v150 = vpop.permute.xlu0 %149
    %152 = vset.pattern.permute.xlu0 1
    %153 = vperm.xlu0 %152, %v35
    %v154 = vpop.permute.xlu0 %153
    %v156 = vmul.f32 %v146, %v150
    %v157 = vmul.f32 %v147, %v154
    %158 = vset.pattern.permute.xlu0 1
    %159 = vperm.xlu0 %158, %v36
    %v160 = vpop.permute.xlu0 %159
    %162 = vset.pattern.permute.xlu0 1
    %163 = vperm.xlu0 %162, %v37
    %v164 = vpop.permute.xlu0 %163
    %v166 = vsub.f32 %v160, %v133
    %v167 = vsub.f32 %v164, %v133
    %168 = vset.pattern.permute.xlu0 1
    %169 = vperm.xlu0 %168, %v38
    %v170 = vpop.permute.xlu0 %169
    %172 = vset.pattern.permute.xlu0 1
    %173 = vperm.xlu0 %172, %v39
    %v174 = vpop.permute.xlu0 %173
    %v176 = vmul.f32 %v166, %v170
    %v177 = vmul.f32 %v167, %v174
    %v178 = vmin.f32 %v156, %v176
    %v179 = vmin.f32 %v157, %v177
    %v180 = vmax.f32 %v178, 0.0
    %v181 = vmax.f32 %v179, 0.0
    %v182 = vmin.f32 %v180, 1.0
    %v183 = vmin.f32 %v181, 1.0
    %v184 = vmul.f32 %v120, %v182
    %v185 = vmul.f32 %v121, %v183
    %186 = vset.pattern.permute.xlu0 2
    %187 = vperm.xlu0 %186, %v28
    %v188 = vpop.permute.xlu0 %187
    %190 = vset.pattern.permute.xlu0 2
    %191 = vperm.xlu0 %190, %v29
    %v192 = vpop.permute.xlu0 %191
    %v194 = vlaneseq
    %v195 = vshrl.u32 %v194, 7
    %v196 = vsub.s32 2, %v195
    %v197 = vrot.slane %v27, %v196
    %v198 = vmul.f32 %v188, %v197
    %v199 = vmul.f32 %v192, %v197
    %v200 = vadd.f32 %v136, %v198
    %v201 = vadd.f32 %v137, %v199
    %202 = vset.pattern.permute.xlu0 2
    %203 = vperm.xlu0 %202, %v32
    %v204 = vpop.permute.xlu0 %203
    %206 = vset.pattern.permute.xlu0 2
    %207 = vperm.xlu0 %206, %v33
    %v208 = vpop.permute.xlu0 %207
    %v210 = vsub.f32 %v197, %v204
    %v211 = vsub.f32 %v197, %v208
    %212 = vset.pattern.permute.xlu0 2
    %213 = vperm.xlu0 %212, %v34
    %v214 = vpop.permute.xlu0 %213
    %216 = vset.pattern.permute.xlu0 2
    %217 = vperm.xlu0 %216, %v35
    %v218 = vpop.permute.xlu0 %217
    %v220 = vmul.f32 %v210, %v214
    %v221 = vmul.f32 %v211, %v218
    %222 = vset.pattern.permute.xlu0 2
    %223 = vperm.xlu0 %222, %v36
    %v224 = vpop.permute.xlu0 %223
    %226 = vset.pattern.permute.xlu0 2
    %227 = vperm.xlu0 %226, %v37
    %v228 = vpop.permute.xlu0 %227
    %v230 = vsub.f32 %v224, %v197
    %v231 = vsub.f32 %v228, %v197
    %232 = vset.pattern.permute.xlu0 2
    %233 = vperm.xlu0 %232, %v38
    %v234 = vpop.permute.xlu0 %233
    %236 = vset.pattern.permute.xlu0 2
    %237 = vperm.xlu0 %236, %v39
    %v238 = vpop.permute.xlu0 %237
    %v240 = vmul.f32 %v230, %v234
    %v241 = vmul.f32 %v231, %v238
    %v242 = vmin.f32 %v220, %v240
    %v243 = vmin.f32 %v221, %v241
    %v244 = vmax.f32 %v242, 0.0
    %v245 = vmax.f32 %v243, 0.0
    %v246 = vmin.f32 %v244, 1.0
    %v247 = vmin.f32 %v245, 1.0
    %v248 = vmul.f32 %v184, %v246
    %v249 = vmul.f32 %v185, %v247
    %250 = vset.pattern.permute.xlu0 3
    %251 = vperm.xlu0 %250, %v28
    %v252 = vpop.permute.xlu0 %251
    %254 = vset.pattern.permute.xlu0 3
    %255 = vperm.xlu0 %254, %v29
    %v256 = vpop.permute.xlu0 %255
    %v258 = vlaneseq
    %v259 = vshrl.u32 %v258, 7
    %v260 = vsub.s32 3, %v259
    %v261 = vrot.slane %v27, %v260
    %v262 = vmul.f32 %v252, %v261
    %v263 = vmul.f32 %v256, %v261
    %v264 = vadd.f32 %v200, %v262
    %v265 = vadd.f32 %v201, %v263
    %266 = vset.pattern.permute.xlu0 3
    %267 = vperm.xlu0 %266, %v32
    %v268 = vpop.permute.xlu0 %267
    %270 = vset.pattern.permute.xlu0 3
    %271 = vperm.xlu0 %270, %v33
    %v272 = vpop.permute.xlu0 %271
    %v274 = vsub.f32 %v261, %v268
    %v275 = vsub.f32 %v261, %v272
    %276 = vset.pattern.permute.xlu0 3
    %277 = vperm.xlu0 %276, %v34
    %v278 = vpop.permute.xlu0 %277
    %280 = vset.pattern.permute.xlu0 3
    %281 = vperm.xlu0 %280, %v35
    %v282 = vpop.permute.xlu0 %281
    %v284 = vmul.f32 %v274, %v278
    %v285 = vmul.f32 %v275, %v282
    %286 = vset.pattern.permute.xlu0 3
    %287 = vperm.xlu0 %286, %v36
    %v288 = vpop.permute.xlu0 %287
    %290 = vset.pattern.permute.xlu0 3
    %291 = vperm.xlu0 %290, %v37
    %v292 = vpop.permute.xlu0 %291
    %v294 = vsub.f32 %v288, %v261
    %v295 = vsub.f32 %v292, %v261
    %296 = vset.pattern.permute.xlu0 3
    %297 = vperm.xlu0 %296, %v38
    %v298 = vpop.permute.xlu0 %297
    %300 = vset.pattern.permute.xlu0 3
    %301 = vperm.xlu0 %300, %v39
    %v302 = vpop.permute.xlu0 %301
    %v304 = vmul.f32 %v294, %v298
    %v305 = vmul.f32 %v295, %v302
    %v306 = vmin.f32 %v284, %v304
    %v307 = vmin.f32 %v285, %v305
    %v308 = vmax.f32 %v306, 0.0
    %v309 = vmax.f32 %v307, 0.0
    %v310 = vmin.f32 %v308, 1.0
    %v311 = vmin.f32 %v309, 1.0
    %v312 = vmul.f32 %v248, %v310
    %v313 = vmul.f32 %v249, %v311
    %314 = vset.pattern.permute.xlu0 4
    %315 = vperm.xlu0 %314, %v28
    %v316 = vpop.permute.xlu0 %315
    %318 = vset.pattern.permute.xlu0 4
    %319 = vperm.xlu0 %318, %v29
    %v320 = vpop.permute.xlu0 %319
    %v322 = vlaneseq
    %v323 = vshrl.u32 %v322, 7
    %v324 = vsub.s32 4, %v323
    %v325 = vrot.slane %v27, %v324
    %v326 = vmul.f32 %v316, %v325
    %v327 = vmul.f32 %v320, %v325
    %v328 = vadd.f32 %v264, %v326
    %v329 = vadd.f32 %v265, %v327
    %330 = vset.pattern.permute.xlu0 4
    %331 = vperm.xlu0 %330, %v32
    %v332 = vpop.permute.xlu0 %331
    %334 = vset.pattern.permute.xlu0 4
    %335 = vperm.xlu0 %334, %v33
    %v336 = vpop.permute.xlu0 %335
    %v338 = vsub.f32 %v325, %v332
    %v339 = vsub.f32 %v325, %v336
    %340 = vset.pattern.permute.xlu0 4
    %341 = vperm.xlu0 %340, %v34
    %v342 = vpop.permute.xlu0 %341
    %344 = vset.pattern.permute.xlu0 4
    %345 = vperm.xlu0 %344, %v35
    %v346 = vpop.permute.xlu0 %345
    %v348 = vmul.f32 %v338, %v342
    %v349 = vmul.f32 %v339, %v346
    %350 = vset.pattern.permute.xlu0 4
    %351 = vperm.xlu0 %350, %v36
    %v352 = vpop.permute.xlu0 %351
    %354 = vset.pattern.permute.xlu0 4
    %355 = vperm.xlu0 %354, %v37
    %v356 = vpop.permute.xlu0 %355
    %v358 = vsub.f32 %v352, %v325
    %v359 = vsub.f32 %v356, %v325
    %360 = vset.pattern.permute.xlu0 4
    %361 = vperm.xlu0 %360, %v38
    %v362 = vpop.permute.xlu0 %361
    %364 = vset.pattern.permute.xlu0 4
    %365 = vperm.xlu0 %364, %v39
    %v366 = vpop.permute.xlu0 %365
    %v368 = vmul.f32 %v358, %v362
    %v369 = vmul.f32 %v359, %v366
    %v370 = vmin.f32 %v348, %v368
    %v371 = vmin.f32 %v349, %v369
    %v372 = vmax.f32 %v370, 0.0
    %v373 = vmax.f32 %v371, 0.0
    %v374 = vmin.f32 %v372, 1.0
    %v375 = vmin.f32 %v373, 1.0
    %v376 = vmul.f32 %v312, %v374
    %v377 = vmul.f32 %v313, %v375
    %378 = vset.pattern.permute.xlu0 5
    %379 = vperm.xlu0 %378, %v28
    %v380 = vpop.permute.xlu0 %379
    %382 = vset.pattern.permute.xlu0 5
    %383 = vperm.xlu0 %382, %v29
    %v384 = vpop.permute.xlu0 %383
    %v386 = vlaneseq
    %v387 = vshrl.u32 %v386, 7
    %v388 = vsub.s32 5, %v387
    %v389 = vrot.slane %v27, %v388
    %v390 = vmul.f32 %v380, %v389
    %v391 = vmul.f32 %v384, %v389
    %v392 = vadd.f32 %v328, %v390
    %v393 = vadd.f32 %v329, %v391
    %394 = vset.pattern.permute.xlu0 5
    %395 = vperm.xlu0 %394, %v32
    %v396 = vpop.permute.xlu0 %395
    %398 = vset.pattern.permute.xlu0 5
    %399 = vperm.xlu0 %398, %v33
    %v400 = vpop.permute.xlu0 %399
    %v402 = vsub.f32 %v389, %v396
    %v403 = vsub.f32 %v389, %v400
    %404 = vset.pattern.permute.xlu0 5
    %405 = vperm.xlu0 %404, %v34
    %v406 = vpop.permute.xlu0 %405
    %408 = vset.pattern.permute.xlu0 5
    %409 = vperm.xlu0 %408, %v35
    %v410 = vpop.permute.xlu0 %409
    %v412 = vmul.f32 %v402, %v406
    %v413 = vmul.f32 %v403, %v410
    %414 = vset.pattern.permute.xlu0 5
    %415 = vperm.xlu0 %414, %v36
    %v416 = vpop.permute.xlu0 %415
    %418 = vset.pattern.permute.xlu0 5
    %419 = vperm.xlu0 %418, %v37
    %v420 = vpop.permute.xlu0 %419
    %v422 = vsub.f32 %v416, %v389
    %v423 = vsub.f32 %v420, %v389
    %424 = vset.pattern.permute.xlu0 5
    %425 = vperm.xlu0 %424, %v38
    %v426 = vpop.permute.xlu0 %425
    %428 = vset.pattern.permute.xlu0 5
    %429 = vperm.xlu0 %428, %v39
    %v430 = vpop.permute.xlu0 %429
    %v432 = vmul.f32 %v422, %v426
    %v433 = vmul.f32 %v423, %v430
    %v434 = vmin.f32 %v412, %v432
    %v435 = vmin.f32 %v413, %v433
    %v436 = vmax.f32 %v434, 0.0
    %v437 = vmax.f32 %v435, 0.0
    %v438 = vmin.f32 %v436, 1.0
    %v439 = vmin.f32 %v437, 1.0
    %v440 = vmul.f32 %v376, %v438
    %v441 = vmul.f32 %v377, %v439
    %442 = vset.pattern.permute.xlu0 6
    %443 = vperm.xlu0 %442, %v28
    %v444 = vpop.permute.xlu0 %443
    %446 = vset.pattern.permute.xlu0 6
    %447 = vperm.xlu0 %446, %v29
    %v448 = vpop.permute.xlu0 %447
    %v450 = vlaneseq
    %v451 = vshrl.u32 %v450, 7
    %v452 = vsub.s32 6, %v451
    %v453 = vrot.slane %v27, %v452
    %v454 = vmul.f32 %v444, %v453
    %v455 = vmul.f32 %v448, %v453
    %v456 = vadd.f32 %v392, %v454
    %v457 = vadd.f32 %v393, %v455
    %458 = vset.pattern.permute.xlu0 6
    %459 = vperm.xlu0 %458, %v32
    %v460 = vpop.permute.xlu0 %459
    %462 = vset.pattern.permute.xlu0 6
    %463 = vperm.xlu0 %462, %v33
    %v464 = vpop.permute.xlu0 %463
    %v466 = vsub.f32 %v453, %v460
    %v467 = vsub.f32 %v453, %v464
    %468 = vset.pattern.permute.xlu0 6
    %469 = vperm.xlu0 %468, %v34
    %v470 = vpop.permute.xlu0 %469
    %472 = vset.pattern.permute.xlu0 6
    %473 = vperm.xlu0 %472, %v35
    %v474 = vpop.permute.xlu0 %473
    %v476 = vmul.f32 %v466, %v470
    %v477 = vmul.f32 %v467, %v474
    %478 = vset.pattern.permute.xlu0 6
    %479 = vperm.xlu0 %478, %v36
    %v480 = vpop.permute.xlu0 %479
    %482 = vset.pattern.permute.xlu0 6
    %483 = vperm.xlu0 %482, %v37
    %v484 = vpop.permute.xlu0 %483
    %v486 = vsub.f32 %v480, %v453
    %v487 = vsub.f32 %v484, %v453
    %488 = vset.pattern.permute.xlu0 6
    %489 = vperm.xlu0 %488, %v38
    %v490 = vpop.permute.xlu0 %489
    %492 = vset.pattern.permute.xlu0 6
    %493 = vperm.xlu0 %492, %v39
    %v494 = vpop.permute.xlu0 %493
    %v496 = vmul.f32 %v486, %v490
    %v497 = vmul.f32 %v487, %v494
    %v498 = vmin.f32 %v476, %v496
    %v499 = vmin.f32 %v477, %v497
    %v500 = vmax.f32 %v498, 0.0
    %v501 = vmax.f32 %v499, 0.0
    %v502 = vmin.f32 %v500, 1.0
    %v503 = vmin.f32 %v501, 1.0
    %v504 = vmul.f32 %v440, %v502
    %v505 = vmul.f32 %v441, %v503
    %506 = vset.pattern.permute.xlu0 7
    %507 = vperm.xlu0 %506, %v28
    %v508 = vpop.permute.xlu0 %507
    %510 = vset.pattern.permute.xlu0 7
    %511 = vperm.xlu0 %510, %v29
    %v512 = vpop.permute.xlu0 %511
    %v514 = vlaneseq
    %v515 = vshrl.u32 %v514, 7
    %v516 = vsub.s32 7, %v515
    %v517 = vrot.slane %v27, %v516
    %v518 = vmul.f32 %v508, %v517
    %v519 = vmul.f32 %v512, %v517
    %v520 = vadd.f32 %v456, %v518
    %v521 = vadd.f32 %v457, %v519
    %522 = vset.pattern.permute.xlu0 7
    %523 = vperm.xlu0 %522, %v32
    %v524 = vpop.permute.xlu0 %523
    %526 = vset.pattern.permute.xlu0 7
    %527 = vperm.xlu0 %526, %v33
    %v528 = vpop.permute.xlu0 %527
    %v530 = vsub.f32 %v517, %v524
    %v531 = vsub.f32 %v517, %v528
    %532 = vset.pattern.permute.xlu0 7
    %533 = vperm.xlu0 %532, %v34
    %v534 = vpop.permute.xlu0 %533
    %536 = vset.pattern.permute.xlu0 7
    %537 = vperm.xlu0 %536, %v35
    %v538 = vpop.permute.xlu0 %537
    %v540 = vmul.f32 %v530, %v534
    %v541 = vmul.f32 %v531, %v538
    %542 = vset.pattern.permute.xlu0 7
    %543 = vperm.xlu0 %542, %v36
    %v544 = vpop.permute.xlu0 %543
    %546 = vset.pattern.permute.xlu0 7
    %547 = vperm.xlu0 %546, %v37
    %v548 = vpop.permute.xlu0 %547
    %v550 = vsub.f32 %v544, %v517
    %v551 = vsub.f32 %v548, %v517
    %552 = vset.pattern.permute.xlu0 7
    %553 = vperm.xlu0 %552, %v38
    %v554 = vpop.permute.xlu0 %553
    %556 = vset.pattern.permute.xlu0 7
    %557 = vperm.xlu0 %556, %v39
    %v558 = vpop.permute.xlu0 %557
    %v560 = vmul.f32 %v550, %v554
    %v561 = vmul.f32 %v551, %v558
    %v562 = vmin.f32 %v540, %v560
    %v563 = vmin.f32 %v541, %v561
    %v564 = vmax.f32 %v562, 0.0
    %v565 = vmax.f32 %v563, 0.0
    %v566 = vmin.f32 %v564, 1.0
    %v567 = vmin.f32 %v565, 1.0
    %v568 = vmul.f32 %v504, %v566
    %v569 = vmul.f32 %v505, %v567
    %v570 = vmul.f32 %v520, %v568
    %v571 = vmul.f32 %v521, %v569
    %vm572 = vcmask 64512
    %v573 = vsel %vm572, %v570, 0.0
    %v574 = vsel %vm572, %v571, 0.0
    %v575 = vadd.f32 %v573, %v574
    %v576 = vrot.slane %v575, 4
    %v577 = vadd.f32 %v575, %v576
    %v578 = vrot.slane %v577, 2
    %v579 = vadd.f32 %v577, %v578
    %v580 = vrot.slane %v579, 1
    %v581 = vadd.f32 %v579, %v580
    %v582 = vsel %vm572, %v568, 0.0
    %v583 = vsel %vm572, %v569, 0.0
    %v584 = vadd.f32 %v582, %v583
    %v585 = vrot.slane %v584, 4
    %v586 = vadd.f32 %v584, %v585
    %v587 = vrot.slane %v586, 2
    %v588 = vadd.f32 %v586, %v587
    %v589 = vrot.slane %v588, 1
    %v590 = vadd.f32 %v588, %v589
    %v591 = vadd.f32 %v590, 1e-13
    %v592 = vrcp.pop %v591
    %v593 = vmul.f32 %v581, %v592
    %vm594 = vcmask 57344
    %595 = vst.msk [vmem:[#allocation2] sm:$0x1] %vm594, %v593
    // Predicated region
    $region30: #{tpu_custom_call.1} parent=1 // pred_check
      _
    $region31: #{tpu_custom_call.1} parent=1 // pred_check_branch
      %597 = sbr.rel (0) target = $region33
    $region32: #{tpu_custom_call.1} parent=1 // pred_region
      %s599 = ssub.s32 16, 16
      %600 = vsyncadd [#allocation3], %s599
      %s602 = sshll.u32 [#allocation2], 4
      %s603 = int_to_ptr.vmem [resolvable:$true] %s602
      %605 = dma.vmem_to_hbm [thread:$0]  %s603, 16, %s7, [#allocation3]
    $region33: #{tpu_custom_call.1} parent=1 // pred_fallthru
      _
    // Predicated region
    $region34: #{tpu_custom_call.1} parent=1 // pred_check
      _
    $region35: #{tpu_custom_call.1} parent=1 // pred_check_branch
      %607 = sbr.rel (0) target = $region37
    $region36: #{tpu_custom_call.1} parent=1 // pred_region
      %608 = dma.done [#allocation3], 16
    $region37: #{tpu_custom_call.1} parent=1 // pred_fallthru
      _
    %609 = vsyncpa [#allocation3], 1

</llo_original>
